<compile_context>
chip_gen: v6e
topology: v6e:2x2x1
jax: 0.10.0
libtpu: 0.0.40
codegen_flags: <defaults>
</compile_context>

<pallas_src>
import functools

import jax
import jax.numpy as jnp
import numpy as np
from jax.experimental import pallas as pl
from jax.experimental.pallas import tpu as pltpu


def _jaccard_accum_kernel(pred_ref, tgt_ref, inter_ref, union_ref, *,
                          num_classes, ignore_index, hw, tile_hw,
                          tiles_per_split, need_mask):
    # pred_ref : (1, C, T) logits for one (split, batch, spatial-tile) step
    # tgt_ref  : (1, 1, T) integer class ids
    # inter_ref, union_ref : (1, 1, C, 1) f32 accumulators, resident across
    #                        the spatial (last, "arbitrary") grid axis.
    k = pl.program_id(2)

    @pl.when(k == 0)
    def _init():
        inter_ref[...] = jnp.zeros_like(inter_ref)
        union_ref[...] = jnp.zeros_like(union_ref)

    p = pred_ref[...].astype(jnp.float32)                      # (1, C, T)
    t = tgt_ref[...].astype(jnp.int32)                         # (1, 1, T)

    if need_mask:
        # Remainder / phantom-tile masking: lanes past the end of HW (partial
        # last tile, or an entire tile past it) must contribute nothing.
        gk = pl.program_id(0) * tiles_per_split + k            # global tile id
        lane = jax.lax.broadcasted_iota(jnp.int32, (1, 1, tile_hw), 2)
        lane_valid = (gk * tile_hw + lane) < hw                # (1, 1, T) bool
        p = jnp.where(lane_valid, p, 0.0)                      # keep exp() sane
    else:
        lane_valid = None

    # Numerically-stable softmax over the class (sublane) axis; the reciprocal
    # of the (1, 1, T) denominator goes to the EUP and is broadcast-multiplied
    # instead of dividing the full (1, C, T) tensor.
    m = jnp.max(p, axis=1, keepdims=True)                      # (1, 1, T)
    e = jnp.exp(p - m)                                         # (1, C, T)
    inv = pl.reciprocal(jnp.sum(e, axis=1, keepdims=True), approx=False)
    p = e * inv                                                # (1, C, T)

    if need_mask:
        p = p * lane_valid.astype(p.dtype)

    if ignore_index is not None:
        valid = (t != ignore_index)                            # (1, 1, T)
        t = jnp.where(valid, t, 0)
        p = p * valid.astype(p.dtype)

    # Class-membership mask instead of a materialized float one-hot tensor.
    cls = jax.lax.broadcasted_iota(jnp.int32, (1, num_classes, 1), 1)
    eq = (t == cls)                                            # (1, C, T) bool
    if need_mask:
        eq = jnp.logical_and(eq, lane_valid)

    inter = jnp.sum(jnp.where(eq, p, 0.0), axis=2, keepdims=True)      # (1,C,1)
    p_sum = jnp.sum(p, axis=2, keepdims=True)                          # (1,C,1)
    t_cnt = jnp.sum(eq.astype(jnp.float32), axis=2, keepdims=True)     # (1,C,1)

    inter_ref[...] += inter.reshape(inter_ref.shape)
    union_ref[...] += (p_sum + t_cnt - inter).reshape(union_ref.shape)


def _vmem_budget_bytes():
    """Per-chip (budget for streamed tiles, scoped-VMEM limit) in bytes."""
    phys = 128 << 20
    try:
        phys = int(pltpu.get_tpu_info().vmem_capacity_bytes)
    except Exception:
        pass  # conservative default if the query is unavailable
    # Keep the double-buffered working set well under physical VMEM (v7x has
    # only 64 MiB), leaving headroom for accumulators / compiler scratch.
    budget = min(phys // 3, 40 << 20)
    limit = int(min(phys * 3 // 4, budget + (24 << 20)))
    return budget, limit


def _choose_tile_hw(hw, num_classes, pred_itemsize, tgt_itemsize, budget):
    """Largest 128-multiple lane tile whose double-buffered bytes fit budget."""
    if hw <= 128:
        return hw                       # single tile equal to the full extent
    per_lane = 2 * (num_classes * pred_itemsize + tgt_itemsize)  # 2 = dbl-buf
    t = budget // max(per_lane, 1)
    t = min(t, 32 * 1024)               # diminishing returns beyond ~32K lanes
    t = min(t, (hw // 128) * 128)       # never exceed the array extent
    t = max((t // 128) * 128, 128)
    return int(t)


def jaccard_loss(pred, target, *, smooth=1.0, ignore_index=None):
    """pred: (B, C, H, W) float logits; target: (B, H, W) integer labels."""
    B, C, H, W = pred.shape
    hw = H * W
    if not jnp.issubdtype(pred.dtype, jnp.floating):
        pred = pred.astype(jnp.float32)
    # Pass inputs through in their native dtypes (no wrapper-side astype ->
    # no extra HBM round-trip); the kernel upcasts in VMEM.
    pred_f = pred.reshape(B, C, hw)
    tgt_f = target.reshape(B, 1, hw)

    budget, vmem_limit = _vmem_budget_bytes()
    tile_hw = _choose_tile_hw(hw, C, pred_f.dtype.itemsize,
                              tgt_f.dtype.itemsize, budget)
    num_tiles = -(-hw // tile_hw)
    # If B is odd (esp. B == 1), split the HW stream in two so both of v7x's
    # TensorCores are busy; harmless on single-TC chips (v5e / v6e).
    num_splits = 2 if (B % 2 == 1 and num_tiles >= 2) else 1
    tiles_per_split = -(-num_tiles // num_splits)
    need_mask = (num_splits * tiles_per_split * tile_hw) != hw

    kernel = functools.partial(
        _jaccard_accum_kernel,
        num_classes=C,
        ignore_index=ignore_index,
        hw=hw,
        tile_hw=tile_hw,
        tiles_per_split=tiles_per_split,
        need_mask=need_mask,
    )

    def in_map(s, b, k):
        gk = s * tiles_per_split + k
        # Clamp phantom tiles (past the end of HW) onto the last real block;
        # their contribution is fully masked out inside the kernel.
        return (b, 0, jnp.minimum(gk, num_tiles - 1))

    acc_spec = pl.BlockSpec((1, 1, C, 1), lambda s, b, k: (s, b, 0, 0))

    inter, union = pl.pallas_call(
        kernel,
        out_shape=(
            jax.ShapeDtypeStruct((num_splits, B, C, 1), jnp.float32),
            jax.ShapeDtypeStruct((num_splits, B, C, 1), jnp.float32),
        ),
        grid=(num_splits, B, tiles_per_split),
        in_specs=[
            pl.BlockSpec((1, C, tile_hw), in_map),
            pl.BlockSpec((1, 1, tile_hw), in_map),
        ],
        out_specs=(acc_spec, acc_spec),
        compiler_params=pltpu.CompilerParams(
            dimension_semantics=("parallel", "parallel", "arbitrary"),
            vmem_limit_bytes=vmem_limit),
    )(pred_f, tgt_f)

    # O(B*C) epilogue in plain JAX: combine splits, jaccard, mean.
    inter = jnp.sum(inter, axis=0)                             # (B, C, 1)
    union = jnp.sum(union, axis=0)
    jacc = (inter + smooth) / (union + smooth)
    return 1.0 - jnp.sum(jacc) / (B * C)


def _jaccard_loss_ref(pred, target, smooth=1.0, ignore_index=None):
    """Pure-JAX reference mirroring the PyTorch module."""
    pred = jax.nn.softmax(pred, axis=1)
    C = pred.shape[1]
    if ignore_index is not None:
        mask = target != ignore_index
        target = target * mask
        pred = pred * mask[:, None, :, :]
    t_oh = jax.nn.one_hot(target, C, dtype=jnp.float32)       # (B, H, W, C)
    t_oh = jnp.transpose(t_oh, (0, 3, 1, 2))                   # (B, C, H, W)
    inter = jnp.sum(pred * t_oh, axis=(2, 3))                  # (B, C)
    union = jnp.sum(pred, axis=(2, 3)) + jnp.sum(t_oh, axis=(2, 3)) - inter
    jacc = jnp.sum((inter + smooth) / (union + smooth), axis=1)   # (B,)
    return 1.0 - jnp.mean(jacc) / C


if __name__ == "__main__":
    key = jax.random.PRNGKey(0)
    k1, k2, k3, k4 = jax.random.split(key, 4)

    # Case 1: even batch, HW an exact multiple of the tile (no masking path).
    B, C, H, W = 2, 4, 16, 16
    pred = jax.random.normal(k1, (B, C, H, W), dtype=jnp.float32)
    target = jax.random.randint(k2, (B, H, W), 0, C, dtype=jnp.int32)
    for ig in (None, 0):
        loss = jaccard_loss(pred, target, smooth=1.0, ignore_index=ig)
        jax.block_until_ready(loss)
        ref = _jaccard_loss_ref(pred, target, smooth=1.0, ignore_index=ig)
        np.testing.assert_allclose(np.asarray(loss), np.asarray(ref),
                                   rtol=1e-5, atol=1e-5)

    # Case 2: odd batch + HW not a multiple of 128 — exercises the 2-way
    # TensorCore split and the remainder-lane masking.
    B2, C2, H2, W2 = 1, 5, 13, 17
    pred2 = jax.random.normal(k3, (B2, C2, H2, W2), dtype=jnp.float32)
    target2 = jax.random.randint(k4, (B2, H2, W2), 0, C2, dtype=jnp.int32)
    for ig in (None, 2):
        loss2 = jaccard_loss(pred2, target2, smooth=1.0, ignore_index=ig)
        jax.block_until_ready(loss2)
        ref2 = _jaccard_loss_ref(pred2, target2, smooth=1.0, ignore_index=ig)
        np.testing.assert_allclose(np.asarray(loss2), np.asarray(ref2),
                                   rtol=1e-5, atol=1e-5)

    print("KERNEL_OK")
</pallas_src>

<mosaic_0001>
module attributes {stable_mosaic.version = 11 : i64} {
  func.func @_jaccard_accum_kernel(%arg0: i32, %arg1: i32, %arg2: i32, %arg3: memref<1x4x256xf32, #tpu.memory_space<vmem>>, %arg4: memref<1x1x256xi32, #tpu.memory_space<vmem>>, %arg5: memref<1x1x4x1xf32, #tpu.memory_space<vmem>>, %arg6: memref<1x1x4x1xf32, #tpu.memory_space<vmem>>) attributes {dimension_semantics = [#tpu.dimension_semantics<parallel>, #tpu.dimension_semantics<parallel>, #tpu.dimension_semantics<arbitrary>], iteration_bounds = array<i64: 1, 2, 1>, scalar_prefetch = 0 : i64, scratch_operands = 0 : i64, tpu.core_type = #tpu.core_type<tc>, window_params = [{transform_indices = @transform_0, window_bounds = array<i64: 1, 4, 256>}, {transform_indices = @transform_1, window_bounds = array<i64: 1, 1, 256>}, {transform_indices = @transform_2, window_bounds = array<i64: 1, 1, 4, 1>}, {transform_indices = @transform_3, window_bounds = array<i64: 1, 1, 4, 1>}]} {
    %c0_i32 = arith.constant 0 : i32
    %0 = arith.cmpi eq, %arg2, %c0_i32 : i32
    %1 = arith.extui %0 : i1 to i32
    %c0_i32_0 = arith.constant 0 : i32
    %2 = arith.cmpi ne, %1, %c0_i32_0 : i32
    scf.if %2 {
      %cst_27 = arith.constant 0.000000e+00 : f32
      %39 = vector.broadcast %cst_27 : f32 to vector<1x1x4x1xf32>
      %c0_28 = arith.constant 0 : index
      %c0_29 = arith.constant 0 : index
      %c0_30 = arith.constant 0 : index
      %c0_31 = arith.constant 0 : index
      %40 = vector.load %arg5[%c0_28, %c0_29, %c0_30, %c0_31] : memref<1x1x4x1xf32, #tpu.memory_space<vmem>>, vector<1x1x4x1xf32>
      tpu.vector_store %arg5[%c0_28, %c0_29, %c0_30, %c0_31], %39 {strides = array<i32>} : memref<1x1x4x1xf32, #tpu.memory_space<vmem>>, vector<1x1x4x1xf32>,
      %cst_32 = arith.constant 0.000000e+00 : f32
      %41 = vector.broadcast %cst_32 : f32 to vector<1x1x4x1xf32>
      %c0_33 = arith.constant 0 : index
      %c0_34 = arith.constant 0 : index
      %c0_35 = arith.constant 0 : index
      %c0_36 = arith.constant 0 : index
      %42 = vector.load %arg6[%c0_33, %c0_34, %c0_35, %c0_36] : memref<1x1x4x1xf32, #tpu.memory_space<vmem>>, vector<1x1x4x1xf32>
      tpu.vector_store %arg6[%c0_33, %c0_34, %c0_35, %c0_36], %41 {strides = array<i32>} : memref<1x1x4x1xf32, #tpu.memory_space<vmem>>, vector<1x1x4x1xf32>,
    } else {
    }
    %c0 = arith.constant 0 : index
    %c0_1 = arith.constant 0 : index
    %c0_2 = arith.constant 0 : index
    %3 = vector.load %arg3[%c0, %c0_1, %c0_2] : memref<1x4x256xf32, #tpu.memory_space<vmem>>, vector<1x4x256xf32>
    %c0_3 = arith.constant 0 : index
    %c0_4 = arith.constant 0 : index
    %c0_5 = arith.constant 0 : index
    %4 = vector.load %arg4[%c0_3, %c0_4, %c0_5] : memref<1x1x256xi32, #tpu.memory_space<vmem>>, vector<1x1x256xi32>
    %cst = arith.constant dense<0xFF800000> : vector<1x256xf32>
    %5 = vector.multi_reduction <maximumf>, %3, %cst [1] : vector<1x4x256xf32> to vector<1x256xf32>
    %6 = vector.shape_cast %5 : vector<1x256xf32> to vector<1x1x256xf32>
    %7 = vector.broadcast %6 : vector<1x1x256xf32> to vector<1x4x256xf32>
    %8 = arith.subf %3, %7 : vector<1x4x256xf32>
    %9 = math.exp %8 : vector<1x4x256xf32>
    %cst_6 = arith.constant dense<0.000000e+00> : vector<1x256xf32>
    %10 = vector.multi_reduction <add>, %9, %cst_6 [1] : vector<1x4x256xf32> to vector<1x256xf32>
    %11 = vector.shape_cast %10 : vector<1x256xf32> to vector<1x1x256xf32>
    %12 = tpu.reciprocal %11 : vector<1x1x256xf32> -> vector<1x1x256xf32>
    %13 = vector.broadcast %12 : vector<1x1x256xf32> to vector<1x4x256xf32>
    %14 = arith.mulf %9, %13 : vector<1x4x256xf32>
    %15 = tpu.iota {dimensions = array<i32: 1>} : vector<1x4x1xi32>
    %16 = vector.broadcast %4 : vector<1x1x256xi32> to vector<1x4x256xi32>
    %17 = vector.broadcast %15 : vector<1x4x1xi32> to vector<1x4x256xi32>
    %18 = arith.cmpi eq, %16, %17 : vector<1x4x256xi32>
    %cst_7 = arith.constant 0.000000e+00 : f32
    %19 = vector.broadcast %cst_7 : f32 to vector<1x4x256xf32>
    %20 = arith.select %18, %14, %19 : vector<1x4x256xi1>, vector<1x4x256xf32>
    %cst_8 = arith.constant dense<0.000000e+00> : vector<1x4xf32>
    %21 = vector.multi_reduction <add>, %20, %cst_8 [2] : vector<1x4x256xf32> to vector<1x4xf32>
    %22 = vector.shape_cast %21 : vector<1x4xf32> to vector<1x4x1xf32>
    %cst_9 = arith.constant dense<0.000000e+00> : vector<1x4xf32>
    %23 = vector.multi_reduction <add>, %14, %cst_9 [2] : vector<1x4x256xf32> to vector<1x4xf32>
    %24 = vector.shape_cast %23 : vector<1x4xf32> to vector<1x4x1xf32>
    %25 = arith.extui %18 : vector<1x4x256xi1> to vector<1x4x256xi32>
    %26 = arith.sitofp %25 : vector<1x4x256xi32> to vector<1x4x256xf32>
    %cst_10 = arith.constant dense<0.000000e+00> : vector<1x4xf32>
    %27 = vector.multi_reduction <add>, %26, %cst_10 [2] : vector<1x4x256xf32> to vector<1x4xf32>
    %28 = vector.shape_cast %27 : vector<1x4xf32> to vector<1x4x1xf32>
    %c0_11 = arith.constant 0 : index
    %c0_12 = arith.constant 0 : index
    %c0_13 = arith.constant 0 : index
    %c0_14 = arith.constant 0 : index
    %29 = vector.load %arg5[%c0_11, %c0_12, %c0_13, %c0_14] : memref<1x1x4x1xf32, #tpu.memory_space<vmem>>, vector<1x1x4x1xf32>
    %30 = vector.shape_cast %22 : vector<1x4x1xf32> to vector<1x1x4x1xf32>
    %31 = arith.addf %29, %30 : vector<1x1x4x1xf32>
    %c0_15 = arith.constant 0 : index
    %c0_16 = arith.constant 0 : index
    %c0_17 = arith.constant 0 : index
    %c0_18 = arith.constant 0 : index
    %32 = vector.load %arg5[%c0_15, %c0_16, %c0_17, %c0_18] : memref<1x1x4x1xf32, #tpu.memory_space<vmem>>, vector<1x1x4x1xf32>
    tpu.vector_store %arg5[%c0_15, %c0_16, %c0_17, %c0_18], %31 {strides = array<i32>} : memref<1x1x4x1xf32, #tpu.memory_space<vmem>>, vector<1x1x4x1xf32>,
    %c0_19 = arith.constant 0 : index
    %c0_20 = arith.constant 0 : index
    %c0_21 = arith.constant 0 : index
    %c0_22 = arith.constant 0 : index
    %33 = vector.load %arg6[%c0_19, %c0_20, %c0_21, %c0_22] : memref<1x1x4x1xf32, #tpu.memory_space<vmem>>, vector<1x1x4x1xf32>
    %34 = arith.addf %24, %28 : vector<1x4x1xf32>
    %35 = arith.subf %34, %22 : vector<1x4x1xf32>
    %36 = vector.shape_cast %35 : vector<1x4x1xf32> to vector<1x1x4x1xf32>
    %37 = arith.addf %33, %36 : vector<1x1x4x1xf32>
    %c0_23 = arith.constant 0 : index
    %c0_24 = arith.constant 0 : index
    %c0_25 = arith.constant 0 : index
    %c0_26 = arith.constant 0 : index
    %38 = vector.load %arg6[%c0_23, %c0_24, %c0_25, %c0_26] : memref<1x1x4x1xf32, #tpu.memory_space<vmem>>, vector<1x1x4x1xf32>
    tpu.vector_store %arg6[%c0_23, %c0_24, %c0_25, %c0_26], %37 {strides = array<i32>} : memref<1x1x4x1xf32, #tpu.memory_space<vmem>>, vector<1x1x4x1xf32>,
    return
  }
  func.func @transform_0(%arg0: i32, %arg1: i32, %arg2: i32) -> (i32, i32, i32) {
    %c1_i32 = arith.constant 1 : i32
    %0 = arith.muli %arg0, %c1_i32 : i32
    %1 = arith.addi %0, %arg2 : i32
    %c0_i32 = arith.constant 0 : i32
    %2 = arith.minsi %1, %c0_i32 : i32
    %c0_i32_0 = arith.constant 0 : i32
    %c0_i32_1 = arith.constant 0 : i32
    return %arg1, %c0_i32_0, %2 : i32, i32, i32
  }
  func.func @transform_1(%arg0: i32, %arg1: i32, %arg2: i32) -> (i32, i32, i32) {
    %c1_i32 = arith.constant 1 : i32
    %0 = arith.muli %arg0, %c1_i32 : i32
    %1 = arith.addi %0, %arg2 : i32
    %c0_i32 = arith.constant 0 : i32
    %2 = arith.minsi %1, %c0_i32 : i32
    %c0_i32_0 = arith.constant 0 : i32
    %c0_i32_1 = arith.constant 0 : i32
    return %arg1, %c0_i32_0, %2 : i32, i32, i32
  }
  func.func @transform_2(%arg0: i32, %arg1: i32, %arg2: i32) -> (i32, i32, i32, i32) {
    %c0_i32 = arith.constant 0 : i32
    %c0_i32_0 = arith.constant 0 : i32
    %c0_i32_1 = arith.constant 0 : i32
    return %arg0, %arg1, %c0_i32, %c0_i32_0 : i32, i32, i32, i32
  }
  func.func @transform_3(%arg0: i32, %arg1: i32, %arg2: i32) -> (i32, i32, i32, i32) {
    %c0_i32 = arith.constant 0 : i32
    %c0_i32_0 = arith.constant 0 : i32
    %c0_i32_1 = arith.constant 0 : i32
    return %arg0, %arg1, %c0_i32, %c0_i32_0 : i32, i32, i32, i32
  }
}

</mosaic_0001>

<llo_original>
// kernel: tpu_custom_call.1
$region0: #{tpu_custom_call.1}
  #allocation0 [shape = 'u32[]', space=smem, size = 0x4, offset = 0x4, fixed_abs, tag = 'smem constant byte address 0x4 - core index']
  #allocation1 [shape = 'u32[144,128]{1,0:T(1,128)}', space=vmem, size = 0x12000, scoped, tag = 'internal scratch']
  %s0 = inlined_call_operand.hbm [shape: f32[2,4,256], index: 0, kind: input, shape index: {}]
  %s1 = inlined_call_operand.hbm [shape: s32[2,1,256], index: 1, kind: input, shape index: {}]
  %s2 = inlined_call_operand.vmem [shape: f32[1,2,4,1], index: 2, kind: output, shape index: {0}]
  %s3 = inlined_call_operand.vmem [shape: f32[1,2,4,1], index: 3, kind: output, shape index: {1}]
  %4 = xla_tuple %s2, %s3
  %s5 = sld [smem:[#allocation0]]
  $region61: #{tpu_custom_call.1} parent=0
    _
  %s7 = ssub.s32 1, %s5
  %s8 = scalar_select 0, %s7, %s5
  $region1: #{tpu_custom_call.1} parent=0
    #allocation2 [shape = 'u8[8192]{0}', space=vmem, size = 0x2000, scoped, tag = 'input window, operand 0']
    #allocation3 [shape = 's32[2]{0}', space=sflag, size = 0x8, scoped, tag = 'scoped memory for tpu_custom_call.1']
    #allocation4 [shape = 'u8[2048]{0}', space=vmem, size = 0x800, scoped, tag = 'input window, operand 1']
    #allocation5 [shape = 's32[2]{0}', space=sflag, size = 0x8, scoped, tag = 'scoped memory for tpu_custom_call.1']
    %9 = vsyncpa [#allocation3], 0
    %s10 = scalar_lea.sflag [#allocation3], 1
    %11 = vsyncpa %s10, 0
    %12 = vsyncpa [#allocation5], 0
    %s13 = scalar_lea.sflag [#allocation5], 1
    %14 = vsyncpa %s13, 0
    loop: start=0, step=1, limit=4
    $region2: #{tpu_custom_call.1} parent=1 // loop_pre_header
      _
    $region3: #{tpu_custom_call.1} parent=1 // loop_header
      %s16 = sphi 0, %s20
      %p17 = scmp.ge.s32.totalorder %s16, 4
      %s23 = sphi 0, %s42
      %s24 = sphi 0, %s38
      %s25 = sphi 0, %s34
      %s26 = sphi 0, %s23
      %s27 = sphi 0, %s24
      %s28 = sphi 0, %s25
      %s29 = sphi 0, %s26
      %s30 = sphi 0, %s27
      %s31 = sphi 0, %s28
      %s53 = sphi 0, %s55
      %s56 = sphi 0, %s53
      %s57 = sphi 0, %s56
      %s73 = sphi 0, %s57
      %s87 = sphi 0, %s89
      %s90 = sphi 0, %s87
      %s91 = sphi 0, %s90
      %s107 = sphi 0, %s91
      %s115 = sphi 0, %s117
      %s118 = sphi 0, %s115
      %s119 = sphi 0, %s118
      %s135 = sphi 0, %s119
      %s143 = sphi 0, %s145
      %s146 = sphi 0, %s143
      %s147 = sphi 0, %s146
      %s163 = sphi 0, %s147
    $region4: #{tpu_custom_call.1} parent=1 // loop_header_branch
      %19 = sbr.rel (%p17) target = $region8
    $region5: #{tpu_custom_call.1} parent=1 // loop_body
      %s21 = ssub.s32 %s16, 1
      %s22 = ssub.s32 %s16, 2
      %s32 = sadd.s32 1, %s25
      %p33 = scmp.ge.s32.totalorder %s32, 1
      %s34 = scalar_select %p33, 0, %s32
      %s35 = sadd.s32 1, %s24
      %s36 = scalar_select %p33, %s35, %s24
      %p37 = scmp.ge.s32.totalorder %s36, 2
      %s38 = scalar_select %p37, 0, %s36
      %s39 = sadd.s32 1, %s23
      %s40 = scalar_select %p37, %s39, %s23
      %p41 = scmp.ge.s32.totalorder %s40, 1
      %s42 = scalar_select %p41, 0, %s40
      %s43 = sadd.s32 %s23, %s25
      %p44 = scmp.lt.s32.totalorder %s43, 0
      %s45 = scalar_select %p44, %s43, 0
      %s46 = sadd.s32 %s42, %s34
      %p47 = scmp.lt.s32.totalorder %s46, 0
      %s48 = scalar_select %p47, %s46, 0
      %s49 = ssub.s32 %s24, %s38
      %s50 = ssub.s32 %s45, %s48
      %s51 = sor.u32 %s49, %s50
      %p52 = scmp.eq.s32.totalorder %s51, 0
      %s54 = sadd.s32 %s53, 1
      %s55 = scalar_select %p52, %s53, %s54
      %p58 = pneg %p52
      %p59 = scmp.eq.s32.totalorder %s16, 1
      %p60 = por %p58, %p59
      %p61 = scmp.ne.s32.totalorder %s53, %s56
      %p62 = scmp.eq.s32.totalorder %s16, 0
      %p63 = por %p61, %p62
      %p64 = scmp.ne.s32.totalorder %s53, %s56
      %p65 = scmp.eq.s32.totalorder %s21, 1
      %p66 = por %p64, %p65
      %p67 = scmp.ne.s32.totalorder %s56, %s57
      %p68 = scmp.eq.s32.totalorder %s21, 0
      %p69 = por %p67, %p68
      %p70 = scmp.ne.s32.totalorder %s56, %s57
      %p71 = scmp.eq.s32.totalorder %s22, 1
      %p72 = por %p70, %p71
      %p74 = scmp.ne.s32.totalorder %s57, %s73
      %p75 = scmp.eq.s32.totalorder %s22, 0
      %p76 = por %p74, %p75
      %s77 = sadd.s32 %s23, %s25
      %p78 = scmp.lt.s32.totalorder %s77, 0
      %s79 = scalar_select %p78, %s77, 0
      %s80 = sadd.s32 %s42, %s34
      %p81 = scmp.lt.s32.totalorder %s80, 0
      %s82 = scalar_select %p81, %s80, 0
      %s83 = ssub.s32 %s24, %s38
      %s84 = ssub.s32 %s79, %s82
      %s85 = sor.u32 %s83, %s84
      %p86 = scmp.eq.s32.totalorder %s85, 0
      %s88 = sadd.s32 %s87, 1
      %s89 = scalar_select %p86, %s87, %s88
      %p92 = pneg %p86
      %p93 = scmp.eq.s32.totalorder %s16, 1
      %p94 = por %p92, %p93
      %p95 = scmp.ne.s32.totalorder %s87, %s90
      %p96 = scmp.eq.s32.totalorder %s16, 0
      %p97 = por %p95, %p96
      %p98 = scmp.ne.s32.totalorder %s87, %s90
      %p99 = scmp.eq.s32.totalorder %s21, 1
      %p100 = por %p98, %p99
      %p101 = scmp.ne.s32.totalorder %s90, %s91
      %p102 = scmp.eq.s32.totalorder %s21, 0
      %p103 = por %p101, %p102
      %p104 = scmp.ne.s32.totalorder %s90, %s91
      %p105 = scmp.eq.s32.totalorder %s22, 1
      %p106 = por %p104, %p105
      %p108 = scmp.ne.s32.totalorder %s91, %s107
      %p109 = scmp.eq.s32.totalorder %s22, 0
      %p110 = por %p108, %p109
      %s111 = ssub.s32 %s23, %s42
      %s112 = ssub.s32 %s24, %s38
      %s113 = sor.u32 %s111, %s112
      %p114 = scmp.eq.s32.totalorder %s113, 0
      %s116 = sadd.s32 %s115, 1
      %s117 = scalar_select %p114, %s115, %s116
      %p120 = pneg %p114
      %p121 = scmp.eq.s32.totalorder %s16, 1
      %p122 = por %p120, %p121
      %p123 = scmp.ne.s32.totalorder %s115, %s118
      %p124 = scmp.eq.s32.totalorder %s16, 0
      %p125 = por %p123, %p124
      %p126 = scmp.ne.s32.totalorder %s115, %s118
      %p127 = scmp.eq.s32.totalorder %s21, 1
      %p128 = por %p126, %p127
      %p129 = scmp.ne.s32.totalorder %s118, %s119
      %p130 = scmp.eq.s32.totalorder %s21, 0
      %p131 = por %p129, %p130
      %p132 = scmp.ne.s32.totalorder %s118, %s119
      %p133 = scmp.eq.s32.totalorder %s22, 1
      %p134 = por %p132, %p133
      %p136 = scmp.ne.s32.totalorder %s119, %s135
      %p137 = scmp.eq.s32.totalorder %s22, 0
      %p138 = por %p136, %p137
      %s139 = ssub.s32 %s23, %s42
      %s140 = ssub.s32 %s24, %s38
      %s141 = sor.u32 %s139, %s140
      %p142 = scmp.eq.s32.totalorder %s141, 0
      %s144 = sadd.s32 %s143, 1
      %s145 = scalar_select %p142, %s143, %s144
      %p148 = pneg %p142
      %p149 = scmp.eq.s32.totalorder %s16, 1
      %p150 = por %p148, %p149
      %p151 = scmp.ne.s32.totalorder %s143, %s146
      %p152 = scmp.eq.s32.totalorder %s16, 0
      %p153 = por %p151, %p152
      %p154 = scmp.ne.s32.totalorder %s143, %s146
      %p155 = scmp.eq.s32.totalorder %s21, 1
      %p156 = por %p154, %p155
      %p157 = scmp.ne.s32.totalorder %s146, %s147
      %p158 = scmp.eq.s32.totalorder %s21, 0
      %p159 = por %p157, %p158
      %p160 = scmp.ne.s32.totalorder %s146, %s147
      %p161 = scmp.eq.s32.totalorder %s22, 1
      %p162 = por %p160, %p161
      %p164 = scmp.ne.s32.totalorder %s147, %s163
      %p165 = scmp.eq.s32.totalorder %s22, 0
      %p166 = por %p164, %p165
      %p167 = scmp.le.s32.totalorder 1, %s16
      %p168 = scmp.lt.s32.totalorder %s16, 3
      %p169 = pnand %p167, %p168
      %p170 = pneg %p169
      // Predicated region
      $region9: #{tpu_custom_call.1} parent=5 // pred_check
        _
      $region10: #{tpu_custom_call.1} parent=5 // pred_check_branch
        %172 = sbr.rel (%p169) target = $region12
      $region11: #{tpu_custom_call.1} parent=5 // pred_region
        %s173 = ssub.s32 %s16, 1
      $region12: #{tpu_custom_call.1} parent=5 // pred_fallthru
        _
      %p174 = scmp.lt.s32.totalorder %s16, 2
      // Predicated region
      $region13: #{tpu_custom_call.1} parent=5 // pred_check
        %p175 = pneg %p174
      $region14: #{tpu_custom_call.1} parent=5 // pred_check_branch
        %177 = sbr.rel (%p175) target = $region16
      $region15: #{tpu_custom_call.1} parent=5 // pred_region
        // Predicated region
        $region17: #{tpu_custom_call.1} parent=15 // pred_check
          %p178 = pneg %p63
        $region18: #{tpu_custom_call.1} parent=15 // pred_check_branch
          %180 = sbr.rel (%p178) target = $region20
        $region19: #{tpu_custom_call.1} parent=15 // pred_region
          %s181 = sand.u32 %s53, 1
          %s182 = scalar_lea.sflag [#allocation3], %s181
          %s183 = sand.u32 %s53, 1
          %s184 = smul.addr %s183, 8
          %s185 = scalar_lea.vmem [#allocation2], %s184
          %s186 = sadd.s32 %s23, %s25
          %p187 = scmp.lt.s32.totalorder %s186, 0
          %s188 = scalar_select %p187, %s186, 0
          %s189 = smul.u32 2, %s188
          %s191 = ssub.s32 128, 128
          %192 = vsyncadd %s182, %s191
          %s193 = smul.addr %s24, 2
          %s194 = sadd.s32 %s189, %s193
          %s195 = smul.addr %s194, 64
          %s196 = scalar_lea.hbm %s0, %s195
          %s198 = sshll.u32 %s185, 4
          %s199 = int_to_ptr.vmem [resolvable:$true] %s198
          %201 = dma.hbm_to_vmem [thread:$0]  %s196, 128, %s199, %s182
        $region20: #{tpu_custom_call.1} parent=15 // pred_fallthru
          _
        // Predicated region
        $region21: #{tpu_custom_call.1} parent=15 // pred_check
          %p202 = pneg %p97
        $region22: #{tpu_custom_call.1} parent=15 // pred_check_branch
          %204 = sbr.rel (%p202) target = $region24
        $region23: #{tpu_custom_call.1} parent=15 // pred_region
          %s205 = sand.u32 %s87, 1
          %s206 = scalar_lea.sflag [#allocation5], %s205
          %s207 = sand.u32 %s87, 1
          %s208 = smul.addr %s207, 2
          %s209 = scalar_lea.vmem [#allocation4], %s208
          %s210 = sadd.s32 %s23, %s25
          %p211 = scmp.lt.s32.totalorder %s210, 0
          %s212 = scalar_select %p211, %s210, 0
          %s213 = smul.u32 2, %s212
          %s215 = ssub.s32 32, 32
          %216 = vsyncadd %s206, %s215
          %s217 = smul.addr %s24, 2
          %s218 = sadd.s32 %s213, %s217
          %s219 = smul.addr %s218, 16
          %s220 = scalar_lea.hbm %s1, %s219
          %s222 = sshll.u32 %s209, 4
          %s223 = int_to_ptr.vmem [resolvable:$true] %s222
          %225 = dma.hbm_to_vmem [thread:$0]  %s220, 32, %s223, %s206
        $region24: #{tpu_custom_call.1} parent=15 // pred_fallthru
          _
      $region16: #{tpu_custom_call.1} parent=5 // pred_fallthru
        _
      %p226 = scmp.le.s32.totalorder 1, %s16
      %p227 = scmp.lt.s32.totalorder %s16, 3
      %p228 = pnand %p226, %p227
      %p229 = pneg %p228
      // Predicated region
      $region25: #{tpu_custom_call.1} parent=5 // pred_check
        _
      $region26: #{tpu_custom_call.1} parent=5 // pred_check_branch
        %231 = sbr.rel (%p228) target = $region28
      $region27: #{tpu_custom_call.1} parent=5 // pred_region
        %s232 = ssub.s32 %s16, 1
        %s233 = sand.u32 %s56, 1
        %s234 = scalar_lea.sflag [#allocation3], %s233
        %s235 = sand.u32 %s56, 1
        %s236 = smul.addr %s235, 8
        %s237 = scalar_lea.vmem [#allocation2], %s236
        // Predicated region
        $region29: #{tpu_custom_call.1} parent=27 // pred_check
          %p238 = pneg %p69
        $region30: #{tpu_custom_call.1} parent=27 // pred_check_branch
          %240 = sbr.rel (%p238) target = $region32
        $region31: #{tpu_custom_call.1} parent=27 // pred_region
          %241 = dma.done %s234, 128
        $region32: #{tpu_custom_call.1} parent=27 // pred_fallthru
          _
        %s242 = sand.u32 %s90, 1
        %s243 = scalar_lea.sflag [#allocation5], %s242
        %s244 = sand.u32 %s90, 1
        %s245 = smul.addr %s244, 2
        %s246 = scalar_lea.vmem [#allocation4], %s245
        // Predicated region
        $region33: #{tpu_custom_call.1} parent=27 // pred_check
          %p247 = pneg %p103
        $region34: #{tpu_custom_call.1} parent=27 // pred_check_branch
          %249 = sbr.rel (%p247) target = $region36
        $region35: #{tpu_custom_call.1} parent=27 // pred_region
          %250 = dma.done %s243, 32
        $region36: #{tpu_custom_call.1} parent=27 // pred_fallthru
          _
        %s251 = sand.u32 %s56, 1
        %s252 = scalar_lea.sflag [#allocation3], %s251
        %s253 = sand.u32 %s56, 1
        %s254 = smul.addr %s253, 8
        %s255 = scalar_lea.vmem [#allocation2], %s254
        %p256 = pneg %p69
        %p257 = pneg %p66
        %s258 = sand.u32 %s90, 1
        %s259 = scalar_lea.sflag [#allocation5], %s258
        %s260 = sand.u32 %s90, 1
        %s261 = smul.addr %s260, 2
        %s262 = scalar_lea.vmem [#allocation4], %s261
        %p263 = pneg %p103
        %p264 = pneg %p100
        %p265 = pneg %p131
        %p266 = pneg %p128
        %p267 = scmp.lt.s32.totalorder %s26, 0
        %s268 = scalar_select %p267, %s26, 0
        %p269 = scmp.lt.s32.totalorder %s27, 1
        %s270 = scalar_select %p269, %s27, 1
        %s271 = smul.addr %s268, 2
        %s272 = sadd.s32 %s270, %s271
        %s273 = smul.addr %s272, 4
        %s274 = scalar_lea.vmem %s2, %s273
        %p275 = pneg %p159
        %p276 = pneg %p156
        %p277 = scmp.lt.s32.totalorder %s26, 0
        %s278 = scalar_select %p277, %s26, 0
        %p279 = scmp.lt.s32.totalorder %s27, 1
        %s280 = scalar_select %p279, %s27, 1
        %s281 = smul.addr %s278, 2
        %s282 = sadd.s32 %s280, %s281
        %s283 = smul.addr %s282, 4
        %s284 = scalar_lea.vmem %s3, %s283
        %s285 = sadd.s32 %s26, %s28
        %p286 = scmp.lt.s32.totalorder %s285, 0
        %s287 = scalar_select %p286, %s285, 0
        %s288 = smul.u32 2, %s287
        %s289 = sadd.s32 %s26, %s28
        %p290 = scmp.lt.s32.totalorder %s289, 0
        %s291 = scalar_select %p290, %s289, 0
        %s292 = smul.u32 2, %s291
        %p293 = scmp.lt.s32.totalorder %s26, 0
        %s294 = scalar_select %p293, %s26, 0
        %p295 = scmp.lt.s32.totalorder %s27, 1
        %s296 = scalar_select %p295, %s27, 1
        %s297 = smul.addr %s294, 2
        %s298 = sadd.s32 %s296, %s297
        %s299 = smul.addr %s298, 4
        %s300 = scalar_lea.vmem %s2, %s299
        %p301 = scmp.lt.s32.totalorder %s26, 0
        %s302 = scalar_select %p301, %s26, 0
        %p303 = scmp.lt.s32.totalorder %s27, 1
        %s304 = scalar_select %p303, %s27, 1
        %s305 = smul.addr %s302, 2
        %s306 = sadd.s32 %s304, %s305
        %s307 = smul.addr %s306, 4
        %s308 = scalar_lea.vmem %s3, %s307
        %p309 = scmp.eq.s32.totalorder %s28, 0
        // Predicated region
        $region37: #{tpu_custom_call.1} parent=27 // pred_check
          %p310 = pneg %p309
        $region38: #{tpu_custom_call.1} parent=27 // pred_check_branch
          %312 = sbr.rel (%p310) target = $region40
        $region39: #{tpu_custom_call.1} parent=27 // pred_region
          %vm313 = vcmask 3072
          %314 = vst.msk [vmem:[%s300] sm:$0xf] %vm313, 0.0
          %315 = vst.msk [vmem:[%s308] sm:$0xf] %vm313, 0.0
        $region40: #{tpu_custom_call.1} parent=27 // pred_fallthru
          _
        %v316 = vld [vmem:[%s237] sm:$0xff]
        %v317 = vld [vmem:[%s246] sm:$0x3]
        %v319 = vcombine.high %v316, %v316
        %vm321 = vcmask 1043456
        %v322 = vsel %vm321, %v316, -inf
        %v323 = vrot.slane %v322, 4
        %v324 = vmax.f32 %v322, %v323
        %v325 = vrot.slane %v324, 2
        %v326 = vmax.f32 %v324, %v325
        %v327 = vrot.slane %v326, 1
        %v328 = vmax.f32 %v326, %v327
        %v329 = vsel %vm321, %v319, -inf
        %v330 = vrot.slane %v329, 4
        %v331 = vmax.f32 %v329, %v330
        %v332 = vrot.slane %v331, 2
        %v333 = vmax.f32 %v331, %v332
        %v334 = vrot.slane %v333, 1
        %v335 = vmax.f32 %v333, %v334
        %v338 = vcombine.low %v328, %v335
        %v340 = vsub.f32 %v316, %v338
        %v341 = vmul.f32 %v340, 1.442695
        %v342 = vpow.pop %v341
        %v344 = vcombine.high %v342, %v342
        %v346 = vsel %vm321, %v342, 0.0
        %v347 = vrot.slane %v346, 4
        %v348 = vadd.f32 %v346, %v347
        %v349 = vrot.slane %v348, 2
        %v350 = vadd.f32 %v348, %v349
        %v351 = vrot.slane %v350, 1
        %v352 = vadd.f32 %v350, %v351
        %v353 = vsel %vm321, %v344, 0.0
        %v354 = vrot.slane %v353, 4
        %v355 = vadd.f32 %v353, %v354
        %v356 = vrot.slane %v355, 2
        %v357 = vadd.f32 %v355, %v356
        %v358 = vrot.slane %v357, 1
        %v359 = vadd.f32 %v357, %v358
        %v360 = vrcp.pop %v352
        %v361 = vrcp.pop %v359
        %v364 = vcombine.low %v360, %v361
        %v366 = vmul.f32 %v342, %v364
        %v367 = vlaneseq
        %v368 = vshrl.u32 %v367, 7
        %v369 = vlaneseq
        %v370 = vshrl.u32 %v369, 7
        %v371 = vsub.s32 0, %v370
        %v372 = vrot.slane %v317, %v371
        %v373 = vlaneseq
        %v374 = vshrl.u32 %v373, 7
        %v375 = vsub.s32 1, %v374
        %v376 = vrot.slane %v317, %v375
        %vm377 = vcmp.eq.s32.totalorder %v372, %v368
        %vm378 = vcmp.eq.s32.totalorder %v376, %v368
        %v380 = vcombine.high %v366, %v366
        %v382 = vsel %vm377, %v366, 0.0
        %v383 = vsel %vm378, %v380, 0.0
        %v384 = vsel %vm321, %v382, 0.0
        %v385 = vsel %vm321, %v383, 0.0
        %v386 = vadd.f32 %v384, %v385
        %387 = vadd.xlane.f32.xlu0 %v386
        %v388 = vpop.xlane.xlu0 %387
        %v389 = vsel %vm321, %v366, 0.0
        %v390 = vsel %vm321, %v380, 0.0
        %v391 = vadd.f32 %v389, %v390
        %392 = vadd.xlane.f32.xlu0 %v391
        %v393 = vpop.xlane.xlu0 %392
        %v394 = vsel %vm377, 1, 0
        %v395 = vsel %vm378, 1, 0
        %v396 = vcvt.s32.f32 %v394
        %v397 = vcvt.s32.f32 %v395
        %v398 = vsel %vm321, %v396, 0.0
        %v399 = vsel %vm321, %v397, 0.0
        %v400 = vadd.f32 %v398, %v399
        %401 = vadd.xlane.f32.xlu0 %v400
        %v402 = vpop.xlane.xlu0 %401
        %v403 = vld [vmem:[%s300] sm:$0xf]
        %v404 = vadd.f32 %v403, %v388
        %vm405 = vcmask 3072
        %406 = vst.msk [vmem:[%s300] sm:$0xf] %vm405, %v404
        %v407 = vld [vmem:[%s308] sm:$0xf]
        %v408 = vadd.f32 %v393, %v402
        %v409 = vsub.f32 %v408, %v388
        %v410 = vadd.f32 %v407, %v409
        %411 = vst.msk [vmem:[%s308] sm:$0xf] %vm405, %v410
        %p412 = scmp.lt.s32.totalorder %s26, 0
        %s413 = scalar_select %p412, %s26, 0
        %p414 = scmp.lt.s32.totalorder %s27, 1
        %s415 = scalar_select %p414, %s27, 1
        %s416 = smul.addr %s413, 2
        %s417 = sadd.s32 %s415, %s416
        %s418 = smul.addr %s417, 4
        %s419 = scalar_lea.vmem %s2, %s418
        %p420 = scmp.lt.s32.totalorder %s26, 0
        %s421 = scalar_select %p420, %s26, 0
        %p422 = scmp.lt.s32.totalorder %s27, 1
        %s423 = scalar_select %p422, %s27, 1
        %s424 = smul.addr %s421, 2
        %s425 = sadd.s32 %s423, %s424
        %s426 = smul.addr %s425, 4
        %s427 = scalar_lea.vmem %s3, %s426
        // Predicated region
        $region41: #{tpu_custom_call.1} parent=27 // pred_check
          %p428 = pneg %p128
        $region42: #{tpu_custom_call.1} parent=27 // pred_check_branch
          %430 = sbr.rel (%p428) target = $region44
        $region43: #{tpu_custom_call.1} parent=27 // pred_region
          _
        $region44: #{tpu_custom_call.1} parent=27 // pred_fallthru
          _
        // Predicated region
        $region45: #{tpu_custom_call.1} parent=27 // pred_check
          %p431 = pneg %p156
        $region46: #{tpu_custom_call.1} parent=27 // pred_check_branch
          %433 = sbr.rel (%p431) target = $region48
        $region47: #{tpu_custom_call.1} parent=27 // pred_region
          _
        $region48: #{tpu_custom_call.1} parent=27 // pred_fallthru
          _
      $region28: #{tpu_custom_call.1} parent=5 // pred_fallthru
        _
      %p434 = scmp.le.s32.totalorder 2, %s16
      // Predicated region
      $region49: #{tpu_custom_call.1} parent=5 // pred_check
        %p435 = pneg %p434
      $region50: #{tpu_custom_call.1} parent=5 // pred_check_branch
        %437 = sbr.rel (%p435) target = $region52
      $region51: #{tpu_custom_call.1} parent=5 // pred_region
        %s438 = ssub.s32 %s16, 2
        // Predicated region
        $region53: #{tpu_custom_call.1} parent=51 // pred_check
          %p439 = pneg %p134
        $region54: #{tpu_custom_call.1} parent=51 // pred_check_branch
          %441 = sbr.rel (%p439) target = $region56
        $region55: #{tpu_custom_call.1} parent=51 // pred_region
          %p442 = scmp.lt.s32.totalorder %s29, 0
          %s443 = scalar_select %p442, %s29, 0
          %p444 = scmp.lt.s32.totalorder %s30, 1
          %s445 = scalar_select %p444, %s30, 1
          %s446 = smul.addr %s443, 2
          %s447 = sadd.s32 %s445, %s446
          %s448 = smul.addr %s447, 4
          %s449 = scalar_lea.vmem %s2, %s448
        $region56: #{tpu_custom_call.1} parent=51 // pred_fallthru
          _
        // Predicated region
        $region57: #{tpu_custom_call.1} parent=51 // pred_check
          %p450 = pneg %p162
        $region58: #{tpu_custom_call.1} parent=51 // pred_check_branch
          %452 = sbr.rel (%p450) target = $region60
        $region59: #{tpu_custom_call.1} parent=51 // pred_region
          %p453 = scmp.lt.s32.totalorder %s29, 0
          %s454 = scalar_select %p453, %s29, 0
          %p455 = scmp.lt.s32.totalorder %s30, 1
          %s456 = scalar_select %p455, %s30, 1
          %s457 = smul.addr %s454, 2
          %s458 = sadd.s32 %s456, %s457
          %s459 = smul.addr %s458, 4
          %s460 = scalar_lea.vmem %s3, %s459
        $region60: #{tpu_custom_call.1} parent=51 // pred_fallthru
          _
      $region52: #{tpu_custom_call.1} parent=5 // pred_fallthru
        _
    $region6: #{tpu_custom_call.1} parent=1 // loop_footer
      %s20 = sadd.s32 1, %s16
    $region7: #{tpu_custom_call.1} parent=1 // loop_footer_branch
      %15 = sbr.rel target = $region3
    $region8: #{tpu_custom_call.1} parent=1 // loop_exit
      _
    %461 = vsyncpa [#allocation3], 1
    %s462 = scalar_lea.sflag [#allocation3], 1
    %463 = vsyncpa %s462, 1
    %464 = vsyncpa [#allocation5], 1
    %s465 = scalar_lea.sflag [#allocation5], 1
    %466 = vsyncpa %s465, 1

</llo_original>
